<compile_context>
chip_gen: v5e
topology: v5e:2x2
jax: 0.10.0
libtpu: 0.0.40
codegen_flags: <defaults>
</compile_context>

<pallas_src>
import functools

import jax
import jax.numpy as jnp
from jax.experimental import pallas as pl
from jax.experimental.pallas import tpu as pltpu

LANES = 128
MAX_BLOCK_ROWS = 2048  # (2048, 128) f32 tile = 1 MiB per operand per buffer


def _round_up(n, m):
    return (n + m - 1) // m * m


def _sublane_multiple(dtype):
    """Second-minor block multiple required by this dtype's sublane packing."""
    bits = jnp.dtype(dtype).itemsize * 8
    return max(8, 256 // bits)  # f32 -> 8, bf16/f16 -> 16, int8/bool -> 32


def _num_tensorcores():
    """Best-effort TensorCores-per-chip (2 on v7x, 1 on v5e/v6e)."""
    try:
        info = pltpu.get_tpu_info()
    except Exception:
        return 1
    for attr in ("num_tensorcores", "tensorcore_count", "num_tensor_cores",
                 "tensorcores_per_chip"):
        v = getattr(info, attr, None)
        try:
            if v is not None and int(v) >= 1:
                return int(v)
        except (TypeError, ValueError):
            pass
    ver = getattr(info, "chip_version", None)
    name = str(getattr(ver, "name", ver) or "")
    return 2 if "7" in name else 1


def _pow_term(q, gamma):
    """q ** gamma, specialized to a multiply chain for small integer gamma."""
    g = float(gamma)
    if g.is_integer() and 0 <= int(g) <= 8:
        gi = int(g)
        if gi == 0:
            return jnp.ones_like(q)
        r = q
        for _ in range(gi - 1):
            r = r * q
        return r
    return q ** jnp.float32(g)  # generic (non-integer gamma) fallback


def _focal_elem(x, is_pos, alpha, gamma):
    """Element-wise focal loss in f32 (matches the torch forward).

    NOTE: the clip also bounds any unspecified rows a partial trailing block
    may read, so log() cannot introduce new Inf there; those rows are removed
    by the in-kernel mask (sum path) or OOB-dropped stores ('none' path).
    Do not hoist the clip below the where.
    """
    x = jnp.clip(x, 1e-07, 1.0 - 1e-07)
    p_t = jnp.where(is_pos, x, 1.0 - x)
    # -1 * (1 - p_t)**gamma * log(p_t)  ==  (1 - p_t)**gamma * (-log(p_t))
    fl = _pow_term(1.0 - p_t, gamma) * (-jnp.log(p_t))
    if float(alpha) != 1.0:
        fl = jnp.where(is_pos, fl * jnp.float32(alpha), fl)
    return fl


def _focal_none_kernel(x_ref, t_ref, o_ref, *, alpha, gamma):
    x = x_ref[...].astype(jnp.float32)
    fl = _focal_elem(x, t_ref[...] == 1, alpha, gamma)
    o_ref[...] = fl.astype(o_ref.dtype)  # write caller dtype straight from VMEM


def _focal_sum_kernel(x_ref, t_ref, out_ref, acc_ref, *, alpha, gamma,
                      blocks_per_core, block_rows, total, first_clean_blocks,
                      needs_mask):
    c = pl.program_id(0)        # per-core axis (CORE_PARALLEL on v7x)
    i = pl.program_id(1)        # reduction ("arbitrary") axis
    last = pl.num_programs(1) - 1

    @pl.when(i == 0)
    def _():
        acc_ref[...] = jnp.zeros_like(acc_ref)

    x = x_ref[...].astype(jnp.float32)
    fl = _focal_elem(x, t_ref[...] == 1, alpha, gamma)

    if needs_mask:
        gblk = c * blocks_per_core + i  # global block index

        @pl.when(gblk < first_clean_blocks)
        def _():
            acc_ref[...] += fl

        @pl.when(gblk >= first_clean_blocks)
        def _():
            # Only the tail / phantom block(s) ever reach here.
            rows_i = jax.lax.broadcasted_iota(jnp.int32, fl.shape, 0)
            cols_i = jax.lax.broadcasted_iota(jnp.int32, fl.shape, 1)
            flat_idx = gblk * (block_rows * LANES) + rows_i * LANES + cols_i
            acc_ref[...] += jnp.where(flat_idx < total, fl, 0.0)
    else:
        acc_ref[...] += fl

    @pl.when(i == last)
    def _():
        out_ref[...] = jnp.sum(acc_ref[...]).reshape(1, 1, 1)


def focal_loss_rob(x, target, alpha=1.0, gamma=2.0, reduction="mean"):
    """Focal loss forward (== FocalLossRob.forward).

    The kernel is HBM-bandwidth bound on all TPU generations: prefer narrow
    input dtypes at the call site (bf16 `x`, int8/bool `target`) — they are
    consumed in their native dtype and only upcast to f32 inside VMEM.
    """
    if reduction not in ("mean", "sum", "none"):
        raise NotImplementedError(f"Reduction {reduction} not implemented.")

    orig_shape = x.shape
    out_dtype = x.dtype
    alpha = float(alpha)
    gamma = float(gamma)

    total = int(x.size)
    main = (total // LANES) * LANES      # 128-aligned prefix handled in-kernel
    rem = total - main

    x_flat = x.reshape(-1)
    t_flat = target.reshape(-1)

    # <128-element ragged tail handled with plain jnp (avoids full-array
    # pad / output-slice copies around the kernel).
    tail_fl = None
    if rem:
        tail_fl = _focal_elem(x_flat[main:].astype(jnp.float32),
                              t_flat[main:] == 1, alpha, gamma)

    rows = main // LANES
    if rows == 0:
        # Tiny input: everything lives in the tail; no kernel launch needed.
        if reduction == "none":
            return tail_fl.astype(out_dtype).reshape(orig_shape)
        s = jnp.sum(tail_fl)
        if reduction == "sum":
            return s.astype(out_dtype)
        return (s / jnp.float32(total)).astype(out_dtype)

    x_main = x_flat if rem == 0 else x_flat[:main]
    t_main = t_flat if rem == 0 else t_flat[:main]
    x2d = x_main.reshape(rows, LANES)
    t2d = t_main.reshape(rows, LANES)

    sub_mult = max(_sublane_multiple(x.dtype), _sublane_multiple(target.dtype))
    block_rows = min(MAX_BLOCK_ROWS, _round_up(rows, sub_mult))
    n_blocks = pl.cdiv(rows, block_rows)

    n_elems = rows * LANES
    in_bytes = n_elems * (x.dtype.itemsize + target.dtype.itemsize)

    num_tc = _num_tensorcores()

    if reduction == "none":
        core_split = num_tc >= 2 and n_blocks >= 2
        sem = (pltpu.CORE_PARALLEL,) if core_split else ("parallel",)
        cost = pl.CostEstimate(
            flops=12 * n_elems, transcendentals=n_elems,
            bytes_accessed=int(in_bytes
                               + n_elems * jnp.dtype(out_dtype).itemsize))
        fl2d = pl.pallas_call(
            functools.partial(_focal_none_kernel, alpha=alpha, gamma=gamma),
            out_shape=jax.ShapeDtypeStruct((rows, LANES), out_dtype),
            grid_spec=pltpu.PrefetchScalarGridSpec(
                num_scalar_prefetch=0,
                grid=(n_blocks,),
                in_specs=[pl.BlockSpec((block_rows, LANES), lambda i: (i, 0)),
                          pl.BlockSpec((block_rows, LANES), lambda i: (i, 0))],
                out_specs=pl.BlockSpec((block_rows, LANES), lambda i: (i, 0)),
            ),
            compiler_params=pltpu.CompilerParams(dimension_semantics=sem),
            cost_estimate=cost,
        )(x2d, t2d)
        out_flat = fl2d.reshape(-1)
        if rem:
            out_flat = jnp.concatenate([out_flat, tail_fl.astype(out_dtype)])
        return out_flat.reshape(orig_shape)

    # ---- sum / mean ----
    # Leading core axis only materializes on multi-TC chips (v7x): single-TC
    # v5e/v6e keep num_cores=1 (no phantom blocks, one init, one reduce).
    num_cores = max(1, min(num_tc, n_blocks))
    blocks_per_core = pl.cdiv(n_blocks, num_cores)
    chunk = block_rows * LANES
    first_clean_blocks = main // chunk   # blocks below this are fully valid
    needs_mask = (main % chunk != 0) or (num_cores * blocks_per_core != n_blocks)

    if num_cores * blocks_per_core == n_blocks:
        def in_map(c, i):
            return (c * blocks_per_core + i, 0)
    else:
        # Phantom trailing block(s) on the last core re-read the final real
        # block; the in-kernel mask zeroes their contribution.
        def in_map(c, i):
            return (jnp.minimum(c * blocks_per_core + i, n_blocks - 1), 0)

    core_sem = pltpu.CORE_PARALLEL if num_cores >= 2 else "arbitrary"
    cost = pl.CostEstimate(
        flops=13 * n_elems, transcendentals=n_elems,
        bytes_accessed=int(in_bytes + num_cores * 4))

    partials = pl.pallas_call(
        functools.partial(
            _focal_sum_kernel, alpha=alpha, gamma=gamma,
            blocks_per_core=int(blocks_per_core), block_rows=int(block_rows),
            total=int(main), first_clean_blocks=int(first_clean_blocks),
            needs_mask=bool(needs_mask)),
        out_shape=jax.ShapeDtypeStruct((num_cores, 1, 1), jnp.float32),
        grid_spec=pltpu.PrefetchScalarGridSpec(
            num_scalar_prefetch=0,
            grid=(num_cores, blocks_per_core),
            in_specs=[pl.BlockSpec((block_rows, LANES), in_map),
                      pl.BlockSpec((block_rows, LANES), in_map)],
            out_specs=pl.BlockSpec((1, 1, 1), lambda c, i: (c, 0, 0)),
            scratch_shapes=[pltpu.VMEM((block_rows, LANES), jnp.float32)],
        ),
        compiler_params=pltpu.CompilerParams(
            dimension_semantics=(core_sem, "arbitrary")),
        cost_estimate=cost,
    )(x2d, t2d)

    total_sum = jnp.sum(partials)
    if rem:
        total_sum = total_sum + jnp.sum(tail_fl)
    if reduction == "sum":
        return total_sum.astype(out_dtype)
    # NOTE: matches torch — the scalar loss is returned in x.dtype even though
    # accumulation is f32.
    return (total_sum / jnp.float32(total)).astype(out_dtype)


def _reference(x, target, alpha=1.0, gamma=2.0, reduction="mean"):
    xf = jnp.clip(x.astype(jnp.float32), 1e-07, 1.0 - 1e-07)
    p_t = jnp.where(target == 1, xf, 1.0 - xf)
    fl = -1.0 * (1.0 - p_t) ** gamma * jnp.log(p_t)
    fl = jnp.where(target == 1, fl * alpha, fl)
    if reduction == "mean":
        return fl.mean()
    if reduction == "sum":
        return fl.sum()
    return fl


if __name__ == "__main__":
    key = jax.random.PRNGKey(0)
    ks = jax.random.split(key, 8)

    # 1) Primary small NCHW f32 check: batch=2, channels=4, spatial=16x16.
    shape = (2, 4, 16, 16)
    x = jax.random.uniform(ks[0], shape, jnp.float32, 0.0, 1.0)
    t = jax.random.bernoulli(ks[1], 0.3, shape).astype(jnp.float32)

    out_mean = jax.block_until_ready(focal_loss_rob(x, t, reduction="mean"))
    out_sum = jax.block_until_ready(focal_loss_rob(x, t, reduction="sum"))
    out_none = jax.block_until_ready(focal_loss_rob(x, t, reduction="none"))

    assert jnp.allclose(out_mean, _reference(x, t, reduction="mean"),
                        rtol=1e-5, atol=1e-6), out_mean
    assert jnp.allclose(out_sum, _reference(x, t, reduction="sum"),
                        rtol=1e-5, atol=1e-4), out_sum
    assert jnp.allclose(out_none, _reference(x, t, reduction="none"),
                        rtol=3e-5, atol=1e-6)

    # 2) Multi-block + (on v7x) two-core split + partial-last-block masking.
    shape2 = (2, 3, 224, 200)   # 268800 elems -> 2100 rows -> 2 blocks of 2048
    x2 = jax.random.uniform(ks[2], shape2, jnp.float32, 0.0, 1.0)
    t2 = jax.random.bernoulli(ks[3], 0.3, shape2).astype(jnp.float32)
    out2 = jax.block_until_ready(focal_loss_rob(x2, t2, reduction="mean"))
    assert jnp.allclose(out2, _reference(x2, t2, reduction="mean"),
                        rtol=1e-4, atol=1e-6), out2

    # 3) Ragged total (not a multiple of 128): kernel prefix + jnp tail.
    shape3 = (17, 131)          # 2227 elems -> 2176 prefix + 51 tail
    x3 = jax.random.uniform(ks[4], shape3, jnp.float32, 0.0, 1.0)
    t3 = jax.random.bernoulli(ks[5], 0.3, shape3).astype(jnp.float32)
    out3_m = jax.block_until_ready(focal_loss_rob(x3, t3, reduction="mean"))
    out3_n = jax.block_until_ready(focal_loss_rob(x3, t3, reduction="none"))
    assert jnp.allclose(out3_m, _reference(x3, t3, reduction="mean"),
                        rtol=1e-4, atol=1e-6), out3_m
    assert jnp.allclose(out3_n, _reference(x3, t3, reduction="none"),
                        rtol=3e-5, atol=1e-6)

    # 4) Narrow dtypes: bf16 probabilities, int8 targets ('none' output stays
    #    bf16 straight out of the kernel).
    shape4 = (2, 4, 32, 16)     # 4096 elems -> 32 rows (int8 sublane multiple)
    x4 = jax.random.uniform(ks[6], shape4, jnp.float32, 0.0, 1.0).astype(jnp.bfloat16)
    t4 = jax.random.bernoulli(ks[7], 0.3, shape4).astype(jnp.int8)
    out4_n = jax.block_until_ready(focal_loss_rob(x4, t4, reduction="none"))
    out4_m = jax.block_until_ready(focal_loss_rob(x4, t4, reduction="mean"))
    assert out4_n.dtype == jnp.bfloat16
    assert jnp.allclose(out4_n.astype(jnp.float32),
                        _reference(x4, t4, reduction="none"),
                        rtol=2e-2, atol=2e-2)
    assert jnp.allclose(out4_m.astype(jnp.float32),
                        _reference(x4, t4, reduction="mean"),
                        rtol=2e-2, atol=1e-3), out4_m

    print("KERNEL_OK")
</pallas_src>

<mosaic_0001>
module attributes {stable_mosaic.version = 11 : i64} {
  func.func @_focal_sum_kernel(%arg0: i32, %arg1: i32, %arg2: memref<16x128xf32, #tpu.memory_space<vmem>>, %arg3: memref<16x128xf32, #tpu.memory_space<vmem>>, %arg4: memref<1x1x1xf32, #tpu.memory_space<vmem>>, %arg5: memref<16x128xf32, #tpu.memory_space<vmem>>) attributes {dimension_semantics = [#tpu.dimension_semantics<arbitrary>, #tpu.dimension_semantics<arbitrary>], iteration_bounds = array<i64: 1, 1>, scalar_prefetch = 0 : i64, scratch_operands = 1 : i64, tpu.core_type = #tpu.core_type<tc>, window_params = [{transform_indices = @transform_0, window_bounds = array<i64: 16, 128>}, {transform_indices = @transform_1, window_bounds = array<i64: 16, 128>}, {transform_indices = @transform_2, window_bounds = array<i64: 1, 1, 1>}]} {
    %c0_i32 = arith.constant 0 : i32
    %0 = arith.cmpi eq, %arg1, %c0_i32 : i32
    %1 = arith.extui %0 : i1 to i32
    %c0_i32_0 = arith.constant 0 : i32
    %2 = arith.cmpi ne, %1, %c0_i32_0 : i32
    scf.if %2 {
      %cst_15 = arith.constant 0.000000e+00 : f32
      %27 = vector.broadcast %cst_15 : f32 to vector<16x128xf32>
      %c0_16 = arith.constant 0 : index
      %c0_17 = arith.constant 0 : index
      %28 = vector.load %arg5[%c0_16, %c0_17] : memref<16x128xf32, #tpu.memory_space<vmem>>, vector<16x128xf32>
      tpu.vector_store %arg5[%c0_16, %c0_17], %27 {strides = array<i32>} : memref<16x128xf32, #tpu.memory_space<vmem>>, vector<16x128xf32>,
    } else {
    }
    %c0 = arith.constant 0 : index
    %c0_1 = arith.constant 0 : index
    %3 = vector.load %arg2[%c0, %c0_1] : memref<16x128xf32, #tpu.memory_space<vmem>>, vector<16x128xf32>
    %c0_2 = arith.constant 0 : index
    %c0_3 = arith.constant 0 : index
    %4 = vector.load %arg3[%c0_2, %c0_3] : memref<16x128xf32, #tpu.memory_space<vmem>>, vector<16x128xf32>
    %cst = arith.constant 1.000000e+00 : f32
    %5 = vector.broadcast %cst : f32 to vector<16x128xf32>
    %6 = arith.cmpf oeq, %4, %5 : vector<16x128xf32>
    %cst_4 = arith.constant 1.000000e-07 : f32
    %cst_5 = arith.constant 0.99999988 : f32
    %7 = vector.broadcast %cst_4 : f32 to vector<16x128xf32>
    %8 = arith.maximumf %7, %3 : vector<16x128xf32>
    %9 = vector.broadcast %cst_5 : f32 to vector<16x128xf32>
    %10 = arith.minimumf %9, %8 : vector<16x128xf32>
    %cst_6 = arith.constant 1.000000e+00 : f32
    %11 = vector.broadcast %cst_6 : f32 to vector<16x128xf32>
    %12 = arith.subf %11, %10 : vector<16x128xf32>
    %13 = arith.select %6, %10, %12 : vector<16x128xi1>, vector<16x128xf32>
    %cst_7 = arith.constant 1.000000e+00 : f32
    %14 = vector.broadcast %cst_7 : f32 to vector<16x128xf32>
    %15 = arith.subf %14, %13 : vector<16x128xf32>
    %16 = arith.mulf %15, %15 : vector<16x128xf32>
    %17 = math.log %13 : vector<16x128xf32>
    %cst_8 = arith.constant 0.000000e+00 : f32
    %18 = vector.broadcast %cst_8 : f32 to vector<16x128xf32>
    %19 = arith.subf %18, %17 : vector<16x128xf32>
    %20 = arith.mulf %16, %19 : vector<16x128xf32>
    %c0_9 = arith.constant 0 : index
    %c0_10 = arith.constant 0 : index
    %21 = vector.load %arg5[%c0_9, %c0_10] : memref<16x128xf32, #tpu.memory_space<vmem>>, vector<16x128xf32>
    %22 = arith.addf %21, %20 : vector<16x128xf32>
    %c0_11 = arith.constant 0 : index
    %c0_12 = arith.constant 0 : index
    %23 = vector.load %arg5[%c0_11, %c0_12] : memref<16x128xf32, #tpu.memory_space<vmem>>, vector<16x128xf32>
    tpu.vector_store %arg5[%c0_11, %c0_12], %22 {strides = array<i32>} : memref<16x128xf32, #tpu.memory_space<vmem>>, vector<16x128xf32>,
    %c0_i32_13 = arith.constant 0 : i32
    %24 = arith.cmpi eq, %arg1, %c0_i32_13 : i32
    %25 = arith.extui %24 : i1 to i32
    %c0_i32_14 = arith.constant 0 : i32
    %26 = arith.cmpi ne, %25, %c0_i32_14 : i32
    scf.if %26 {
      %c0_15 = arith.constant 0 : index
      %c0_16 = arith.constant 0 : index
      %27 = vector.load %arg5[%c0_15, %c0_16] : memref<16x128xf32, #tpu.memory_space<vmem>>, vector<16x128xf32>
      %28 = vector.shape_cast %27 : vector<16x128xf32> to vector<1x16x128xf32>
      %cst_17 = arith.constant dense<0.000000e+00> : vector<1xf32>
      %29 = vector.multi_reduction <add>, %28, %cst_17 [1, 2] : vector<1x16x128xf32> to vector<1xf32>
      %30 = vector.shape_cast %29 : vector<1xf32> to vector<1x1x1xf32>
      %31 = vector.extract %30[0, 0, 0] : f32 from vector<1x1x1xf32>
      %32 = vector.broadcast %31 : f32 to vector<1x1x1xf32>
      %c0_18 = arith.constant 0 : index
      %c0_19 = arith.constant 0 : index
      %c0_20 = arith.constant 0 : index
      %33 = vector.load %arg4[%c0_18, %c0_19, %c0_20] : memref<1x1x1xf32, #tpu.memory_space<vmem>>, vector<1x1x1xf32>
      tpu.vector_store %arg4[%c0_18, %c0_19, %c0_20], %32 {strides = array<i32>} : memref<1x1x1xf32, #tpu.memory_space<vmem>>, vector<1x1x1xf32>,
    } else {
    }
    return
  }
  func.func @transform_0(%arg0: i32, %arg1: i32) -> (i32, i32) {
    %c1_i32 = arith.constant 1 : i32
    %0 = arith.muli %arg0, %c1_i32 : i32
    %1 = arith.addi %0, %arg1 : i32
    %c0_i32 = arith.constant 0 : i32
    %c0_i32_0 = arith.constant 0 : i32
    return %1, %c0_i32 : i32, i32
  }
  func.func @transform_1(%arg0: i32, %arg1: i32) -> (i32, i32) {
    %c1_i32 = arith.constant 1 : i32
    %0 = arith.muli %arg0, %c1_i32 : i32
    %1 = arith.addi %0, %arg1 : i32
    %c0_i32 = arith.constant 0 : i32
    %c0_i32_0 = arith.constant 0 : i32
    return %1, %c0_i32 : i32, i32
  }
  func.func @transform_2(%arg0: i32, %arg1: i32) -> (i32, i32, i32) {
    %c0_i32 = arith.constant 0 : i32
    %c0_i32_0 = arith.constant 0 : i32
    %c0_i32_1 = arith.constant 0 : i32
    return %arg0, %c0_i32, %c0_i32_0 : i32, i32, i32
  }
}

</mosaic_0001>

<llo_original>
// kernel: tpu_custom_call.1
$region0: #{tpu_custom_call.1}
  #allocation0 [shape = 'u32[]', space=smem, size = 0x4, offset = 0x4, fixed_abs, tag = 'smem constant byte address 0x4 - core index']
  #allocation1 [shape = 'u32[72,128]{1,0:T(1,128)}', space=vmem, size = 0x9000, scoped, tag = 'internal scratch']
  #allocation2 [shape = 'f32[16,128]{1,0:T(8,128)}', space=vmem, size = 0x2000, scoped, tag = 'scratch operand']
  %s0 = inlined_call_operand.hbm [shape: f32[16,128], index: 0, kind: input, shape index: {}]
  %s1 = inlined_call_operand.hbm [shape: f32[16,128], index: 1, kind: input, shape index: {}]
  %s2 = inlined_call_operand.hbm [shape: f32[1,1,1], index: 2, kind: output, shape index: {}]
  %s3 = sld [smem:[#allocation0]]
  $region34: #{tpu_custom_call.1} parent=0
    _
  %s5 = ssub.s32 1, %s3
  %s6 = scalar_select 0, %s5, %s3
  $region1: #{tpu_custom_call.1} parent=0
    #allocation3 [shape = 'u8[8192]{0}', space=vmem, size = 0x2000, scoped, tag = 'input window, operand 0, single buffered']
    #allocation4 [shape = 's32[1]{0}', space=sflag, size = 0x4, scoped, tag = 'scoped memory for tpu_custom_call.1']
    #allocation5 [shape = 's32[1]{0}', space=sflag, size = 0x4, scoped, tag = 'scoped memory for tpu_custom_call.1']
    #allocation6 [shape = 'u8[8192]{0}', space=vmem, size = 0x2000, scoped, tag = 'input window, operand 1, single buffered']
    #allocation7 [shape = 's32[1]{0}', space=sflag, size = 0x4, scoped, tag = 'scoped memory for tpu_custom_call.1']
    #allocation8 [shape = 'u8[512]{0}', space=vmem, size = 0x400, scoped, tag = 'output window, operand 0, single buffered']
    %7 = vsyncpa [#allocation4], 0
    %8 = vsyncpa [#allocation7], 0
    %9 = vsyncpa [#allocation5], 0
    // Predicated region
    $region2: #{tpu_custom_call.1} parent=1 // pred_check
      _
    $region3: #{tpu_custom_call.1} parent=1 // pred_check_branch
      %11 = sbr.rel (0) target = $region5
    $region4: #{tpu_custom_call.1} parent=1 // pred_region
      %s12 = sadd.s32 0, 0
      %s13 = smul.u32 2, %s12
      %15 = vsyncadd [#allocation4], 0
      %s16 = smul.addr %s13, 8
      %s17 = scalar_lea.hbm %s0, %s16
      %s18 = sshll.u32 %s17, 4
      %s19 = int_to_ptr.hbm [resolvable:$true] %s18
      %s20 = sshll.u32 [#allocation3], 4
      %s21 = int_to_ptr.vmem [resolvable:$true] %s20
      %26 = dma.hbm_to_vmem [thread:$0]  %s19, 256, %s21, [#allocation4], 128, 128, 8
    $region5: #{tpu_custom_call.1} parent=1 // pred_fallthru
      _
    // Predicated region
    $region6: #{tpu_custom_call.1} parent=1 // pred_check
      _
    $region7: #{tpu_custom_call.1} parent=1 // pred_check_branch
      %28 = sbr.rel (0) target = $region9
    $region8: #{tpu_custom_call.1} parent=1 // pred_region
      %s29 = sadd.s32 0, 0
      %s30 = smul.u32 2, %s29
      %32 = vsyncadd [#allocation7], 0
      %s33 = smul.addr %s30, 8
      %s34 = scalar_lea.hbm %s1, %s33
      %s35 = sshll.u32 %s34, 4
      %s36 = int_to_ptr.hbm [resolvable:$true] %s35
      %s37 = sshll.u32 [#allocation6], 4
      %s38 = int_to_ptr.vmem [resolvable:$true] %s37
      %43 = dma.hbm_to_vmem [thread:$0]  %s36, 256, %s38, [#allocation7], 128, 128, 8
    $region9: #{tpu_custom_call.1} parent=1 // pred_fallthru
      _
    // Predicated region
    $region10: #{tpu_custom_call.1} parent=1 // pred_check
      _
    $region11: #{tpu_custom_call.1} parent=1 // pred_check_branch
      %45 = sbr.rel (0) target = $region13
    $region12: #{tpu_custom_call.1} parent=1 // pred_region
      %47 = dma.done [#allocation4], 256
    $region13: #{tpu_custom_call.1} parent=1 // pred_fallthru
      _
    // Predicated region
    $region14: #{tpu_custom_call.1} parent=1 // pred_check
      _
    $region15: #{tpu_custom_call.1} parent=1 // pred_check_branch
      %49 = sbr.rel (0) target = $region17
    $region16: #{tpu_custom_call.1} parent=1 // pred_region
      %51 = dma.done [#allocation7], 256
    $region17: #{tpu_custom_call.1} parent=1 // pred_fallthru
      _
    %s52 = sadd.s32 0, 0
    %s53 = smul.u32 2, %s52
    %s54 = sadd.s32 0, 0
    %s55 = smul.u32 2, %s54
    %p56 = scmp.eq.s32.totalorder 0, 0
    // Predicated region
    $region18: #{tpu_custom_call.1} parent=1 // pred_check
      %p57 = pneg %p56
    $region19: #{tpu_custom_call.1} parent=1 // pred_check_branch
      %59 = sbr.rel (%p57) target = $region21
    $region20: #{tpu_custom_call.1} parent=1 // pred_region
      %60 = vst [vmem:[#allocation2] sm:$0xff] 0.0
      %61 = vst [vmem:[#allocation2 + $0x8] sm:$0xff] 0.0
    $region21: #{tpu_custom_call.1} parent=1 // pred_fallthru
      _
    %v62 = vld [vmem:[#allocation3] sm:$0xff]
    %v63 = vld [vmem:[#allocation3 + $0x8] sm:$0xff]
    %v64 = vld [vmem:[#allocation6] sm:$0xff]
    %v65 = vld [vmem:[#allocation6 + $0x8] sm:$0xff]
    %vm66 = vcmp.eq.f32.partialorder %v64, 1.0
    %vm67 = vcmp.eq.f32.partialorder %v65, 1.0
    %v68 = vmax.f32 %v62, 1e-07
    %v69 = vmax.f32 %v63, 1e-07
    %v70 = vmin.f32 %v68, 0.9999999
    %v71 = vmin.f32 %v69, 0.9999999
    %v72 = vsub.f32 1.0, %v70
    %v73 = vsub.f32 1.0, %v71
    %v74 = vsel %vm66, %v70, %v72
    %v75 = vsel %vm67, %v71, %v73
    %v76 = vsub.f32 1.0, %v74
    %v77 = vsub.f32 1.0, %v75
    %v78 = vmul.f32 %v76, %v76
    %v79 = vmul.f32 %v77, %v77
    %v80 = vlog2.pop %v74
    %v81 = vmul.f32 %v80, 0.6931472
    %v82 = vlog2.pop %v75
    %v83 = vmul.f32 %v82, 0.6931472
    %v84 = vsub.f32 0.0, %v81
    %v85 = vsub.f32 0.0, %v83
    %v86 = vmul.f32 %v78, %v84
    %v87 = vmul.f32 %v79, %v85
    %v88 = vld [vmem:[#allocation2] sm:$0xff]
    %v89 = vld [vmem:[#allocation2 + $0x8] sm:$0xff]
    %v90 = vadd.f32 %v88, %v86
    %v91 = vadd.f32 %v89, %v87
    %92 = vst [vmem:[#allocation2] sm:$0xff] %v90
    %93 = vst [vmem:[#allocation2 + $0x8] sm:$0xff] %v91
    // Predicated region
    $region22: #{tpu_custom_call.1} parent=1 // pred_check
      %p94 = pneg %p56
    $region23: #{tpu_custom_call.1} parent=1 // pred_check_branch
      %96 = sbr.rel (%p94) target = $region25
    $region24: #{tpu_custom_call.1} parent=1 // pred_region
      %v97 = vld [vmem:[#allocation2] sm:$0xff]
      %v98 = vld [vmem:[#allocation2 + $0x8] sm:$0xff]
      %v99 = vadd.f32 %v97, %v98
      %100 = vadd.xlane.f32.xlu0 %v99
      %v101 = vpop.xlane.xlu0 %100
      %v102 = vrot.slane %v101, 4
      %v103 = vadd.f32 %v101, %v102
      %v104 = vrot.slane %v103, 2
      %v105 = vadd.f32 %v103, %v104
      %v106 = vrot.slane %v105, 1
      %v107 = vadd.f32 %v105, %v106
      %s108 = vtos %v107
      %v109 = vstv %s108
      %vm110 = vcmask 0
      %111 = vst.msk [vmem:[#allocation8] sm:$0x1] %vm110, %v109
    $region25: #{tpu_custom_call.1} parent=1 // pred_fallthru
      _
    // Predicated region
    $region26: #{tpu_custom_call.1} parent=1 // pred_check
      _
    $region27: #{tpu_custom_call.1} parent=1 // pred_check_branch
      %113 = sbr.rel (0) target = $region29
    $region28: #{tpu_custom_call.1} parent=1 // pred_region
      %115 = vsyncadd [#allocation5], 0
      %s117 = sshll.u32 [#allocation8], 4
      %s118 = int_to_ptr.vmem [resolvable:$true] %s117
      %s119 = sshll.u32 %s2, 4
      %s120 = int_to_ptr.hbm [resolvable:$true] %s119
      %122 = dma.vmem_to_hbm [thread:$0]  %s118, 16, %s120, [#allocation5]
    $region29: #{tpu_custom_call.1} parent=1 // pred_fallthru
      _
    // Predicated region
    $region30: #{tpu_custom_call.1} parent=1 // pred_check
      _
    $region31: #{tpu_custom_call.1} parent=1 // pred_check_branch
      %124 = sbr.rel (0) target = $region33
    $region32: #{tpu_custom_call.1} parent=1 // pred_region
      %126 = dma.done [#allocation5], 16
    $region33: #{tpu_custom_call.1} parent=1 // pred_fallthru
      _
    %127 = vsyncpa [#allocation4], 1
    %128 = vsyncpa [#allocation7], 1
    %129 = vsyncpa [#allocation5], 1

</llo_original>
